<compile_context>
chip_gen: v6e
topology: v6e:2x2x1
jax: 0.10.0
libtpu: 0.0.40
codegen_flags: <defaults>
</compile_context>

<pallas_src>
import functools

import jax
import jax.numpy as jnp
from jax import lax
from jax.experimental import pallas as pl
from jax.experimental.pallas import tpu as pltpu


def _spatial_gather_kernel(probs_ref, feats_ref, out_ref,
                           m_ref, l_ref, acc_ref, *, scale):
    # probs_ref: (1, K, tHW)   feats_ref: (1, tCf, tHW)   out_ref: (1, K, tCf)
    # m_ref/l_ref: (K, 1) f32  acc_ref: (K, tCf) f32
    hw_step = pl.program_id(2)

    @pl.when(hw_step == 0)
    def _init():
        m_ref[...] = jnp.full_like(m_ref, -jnp.inf)
        l_ref[...] = jnp.zeros_like(l_ref)
        acc_ref[...] = jnp.zeros_like(acc_ref)

    # Softmax statistics in f32 (safe on v5e too: no bf16 VPU/EUP paths).
    p = probs_ref[0].astype(jnp.float32)                     # (K, tHW)
    if scale != 1.0:
        p = p * scale

    m_prev = m_ref[...]                                      # (K, 1)
    m_new = jnp.maximum(m_prev, jnp.max(p, axis=-1, keepdims=True))
    alpha = jnp.exp(m_prev - m_new)                          # rescale old stats
    e = jnp.exp(p - m_new)                                   # (K, tHW)
    l_ref[...] = alpha * l_ref[...] + jnp.sum(e, axis=-1, keepdims=True)

    # Matmul: contract both operands on their last (lane) dim -> (K, tCf).
    # feats stays in its storage dtype; MXU accumulates in f32.
    f = feats_ref[0]                                         # (tCf, tHW)
    part = lax.dot_general(
        e.astype(f.dtype), f,
        dimension_numbers=(((1,), (1,)), ((), ())),
        preferred_element_type=jnp.float32)                  # (K, tCf)
    acc_ref[...] = alpha * acc_ref[...] + part
    m_ref[...] = m_new

    @pl.when(hw_step == pl.num_programs(2) - 1)
    def _finalize():
        inv_l = pl.reciprocal(l_ref[...], approx=True)       # EUP slot, ~free
        out_ref[0] = (acc_ref[...] * inv_l).astype(out_ref.dtype)


def _pick_tile(dim, max_tile, align):
    """Largest multiple of `align` dividing `dim` and <= max_tile, else `dim`."""
    if dim % align != 0:
        return dim
    best = None
    t = align
    while t <= dim and t <= max_tile:
        if dim % t == 0:
            best = t
        t += align
    return best if best is not None else dim


def spatial_gather(feats, probs, scale=1.0, hw_tile=None, cf_tile=None):
    """feats: (B, Cf, H, W), probs: (B, K, H, W) -> (B, Cf, K, 1)."""
    B, Cf, H, W = feats.shape
    Bp, K, Hp, Wp = probs.shape
    assert B == Bp and (H, W) == (Hp, Wp), "feats/probs batch/spatial must match"
    HW = H * W

    feats_flat = feats.reshape(B, Cf, HW)
    probs_flat = probs.reshape(B, K, HW)

    # Cf tile: keeps output lane-dense; splitting Cf also gives a second
    # parallel grid axis (useful for v7x's 2 TensorCores when B is small).
    if cf_tile is None:
        cf_tile = 256 if (Cf > 256 and Cf % 256 == 0) else Cf
    assert Cf % cf_tile == 0
    if cf_tile != Cf:
        assert cf_tile % 128 == 0, "Cf tile must be lane-aligned"

    feats_itemsize = jnp.dtype(feats.dtype).itemsize
    probs_itemsize = jnp.dtype(probs.dtype).itemsize

    # HW tile: multiple of 128 dividing HW, sized so the feats tile stays a
    # few MiB (fits every chip's scoped VMEM with double buffering).
    if hw_tile is None:
        budget = 4 << 20                       # ~4 MiB feats tile per buffer
        max_thw = max(128, budget // max(1, cf_tile * feats_itemsize))
        hw_tile = _pick_tile(HW, min(max_thw, 8192), 128)
    assert HW % hw_tile == 0
    if hw_tile != HW:
        assert hw_tile % 128 == 0, "HW tile must be lane-aligned"

    n_cf = Cf // cf_tile
    n_hw = HW // hw_tile

    kernel = functools.partial(_spatial_gather_kernel, scale=float(scale))

    # Explicit VMEM limit with headroom (raises the 16/32 MiB scoped defaults
    # when tiles are large, stays under v7x's 64 MiB physical VMEM).
    tile_bytes = (K * hw_tile * probs_itemsize
                  + cf_tile * hw_tile * feats_itemsize
                  + K * cf_tile * feats_itemsize)
    scratch_bytes = (2 * K * 1 + K * cf_tile) * 4
    vmem_limit = int(min(max(4 * (2 * tile_bytes + scratch_bytes), 16 << 20),
                         48 << 20))

    out = pl.pallas_call(
        kernel,
        out_shape=jax.ShapeDtypeStruct((B, K, Cf), feats.dtype),
        grid_spec=pltpu.PrefetchScalarGridSpec(
            num_scalar_prefetch=0,
            grid=(B, n_cf, n_hw),
            in_specs=[
                # probs: re-read per Cf tile (small); feats read exactly once.
                pl.BlockSpec((1, K, hw_tile), lambda b, c, s: (b, 0, s)),
                pl.BlockSpec((1, cf_tile, hw_tile), lambda b, c, s: (b, c, s)),
            ],
            out_specs=pl.BlockSpec((1, K, cf_tile), lambda b, c, s: (b, 0, c)),
            scratch_shapes=[
                pltpu.VMEM((K, 1), jnp.float32),        # running max
                pltpu.VMEM((K, 1), jnp.float32),        # running denom
                pltpu.VMEM((K, cf_tile), jnp.float32),  # f32 accumulator
            ],
        ),
        compiler_params=pltpu.CompilerParams(
            dimension_semantics=("parallel", "parallel", "arbitrary"),
            vmem_limit_bytes=vmem_limit,
        ),
    )(probs_flat, feats_flat)

    # (B, K, Cf) -> (B, Cf, K) -> (B, Cf, K, 1)  == permute(0,2,1).unsqueeze(3)
    return jnp.transpose(out, (0, 2, 1))[..., None]


def _reference(feats, probs, scale=1.0):
    B, Cf, H, W = feats.shape
    K = probs.shape[1]
    p = probs.reshape(B, K, H * W).astype(jnp.float32)
    f = feats.reshape(B, Cf, H * W).astype(jnp.float32)
    p = jax.nn.softmax(scale * p, axis=2)
    ctx = jnp.einsum("bks,bcs->bkc", p, f)
    return jnp.transpose(ctx, (0, 2, 1))[..., None].astype(feats.dtype)


if __name__ == "__main__":
    key = jax.random.PRNGKey(0)
    kf, kp = jax.random.split(key)

    B, Cf, K, H, W = 2, 4, 8, 16, 16
    feats = jax.random.normal(kf, (B, Cf, H, W), dtype=jnp.float32)
    probs = jax.random.normal(kp, (B, K, H, W), dtype=jnp.float32)

    # hw_tile=128 forces 2 spatial steps so the online-softmax accumulation
    # path (init / accumulate / finalize) is exercised even at this tiny size.
    out = spatial_gather(feats, probs, scale=1.0, hw_tile=128)
    out = jax.block_until_ready(out)

    ref = _reference(feats, probs, scale=1.0)
    assert out.shape == (B, Cf, K, 1), out.shape
    # Looser tolerance accounts for the EUP approx reciprocal and the online
    # softmax reassociation; a functional bug would deviate by orders more.
    assert jnp.allclose(out, ref, atol=1e-2, rtol=1e-2), "mismatch vs reference"

    print("KERNEL_OK")
</pallas_src>

<mosaic_0001>
module attributes {stable_mosaic.version = 11 : i64} {
  func.func @_spatial_gather_kernel(%arg0: i32, %arg1: i32, %arg2: i32, %arg3: memref<1x8x128xf32, #tpu.memory_space<vmem>>, %arg4: memref<1x4x128xf32, #tpu.memory_space<vmem>>, %arg5: memref<1x8x4xf32, #tpu.memory_space<vmem>>, %arg6: memref<8x1xf32, #tpu.memory_space<vmem>>, %arg7: memref<8x1xf32, #tpu.memory_space<vmem>>, %arg8: memref<8x4xf32, #tpu.memory_space<vmem>>) attributes {dimension_semantics = [#tpu.dimension_semantics<parallel>, #tpu.dimension_semantics<parallel>, #tpu.dimension_semantics<arbitrary>], iteration_bounds = array<i64: 2, 1, 2>, scalar_prefetch = 0 : i64, scratch_operands = 3 : i64, tpu.core_type = #tpu.core_type<tc>, window_params = [{transform_indices = @transform_0, window_bounds = array<i64: 1, 8, 128>}, {transform_indices = @transform_1, window_bounds = array<i64: 1, 4, 128>}, {transform_indices = @transform_2, window_bounds = array<i64: 1, 8, 4>}]} {
    %c0_i32 = arith.constant 0 : i32
    %0 = arith.cmpi eq, %arg2, %c0_i32 : i32
    %1 = arith.extui %0 : i1 to i32
    %c0_i32_0 = arith.constant 0 : i32
    %2 = arith.cmpi ne, %1, %c0_i32_0 : i32
    scf.if %2 {
      %cst_21 = arith.constant 0xFF800000 : f32
      %32 = vector.broadcast %cst_21 : f32 to vector<8x1xf32>
      %c0_22 = arith.constant 0 : index
      %c0_23 = arith.constant 0 : index
      %33 = vector.load %arg6[%c0_22, %c0_23] : memref<8x1xf32, #tpu.memory_space<vmem>>, vector<8x1xf32>
      tpu.vector_store %arg6[%c0_22, %c0_23], %32 {strides = array<i32>} : memref<8x1xf32, #tpu.memory_space<vmem>>, vector<8x1xf32>,
      %cst_24 = arith.constant 0.000000e+00 : f32
      %34 = vector.broadcast %cst_24 : f32 to vector<8x1xf32>
      %c0_25 = arith.constant 0 : index
      %c0_26 = arith.constant 0 : index
      %35 = vector.load %arg7[%c0_25, %c0_26] : memref<8x1xf32, #tpu.memory_space<vmem>>, vector<8x1xf32>
      tpu.vector_store %arg7[%c0_25, %c0_26], %34 {strides = array<i32>} : memref<8x1xf32, #tpu.memory_space<vmem>>, vector<8x1xf32>,
      %cst_27 = arith.constant 0.000000e+00 : f32
      %36 = vector.broadcast %cst_27 : f32 to vector<8x4xf32>
      %c0_28 = arith.constant 0 : index
      %c0_29 = arith.constant 0 : index
      %37 = vector.load %arg8[%c0_28, %c0_29] : memref<8x4xf32, #tpu.memory_space<vmem>>, vector<8x4xf32>
      tpu.vector_store %arg8[%c0_28, %c0_29], %36 {strides = array<i32>} : memref<8x4xf32, #tpu.memory_space<vmem>>, vector<8x4xf32>,
    } else {
    }
    %c0 = arith.constant 0 : index
    %c0_1 = arith.constant 0 : index
    %c0_2 = arith.constant 0 : index
    %3 = vector.load %arg3[%c0, %c0_1, %c0_2] : memref<1x8x128xf32, #tpu.memory_space<vmem>>, vector<1x8x128xf32>
    %4 = vector.shape_cast %3 : vector<1x8x128xf32> to vector<8x128xf32>
    %c0_3 = arith.constant 0 : index
    %c0_4 = arith.constant 0 : index
    %5 = vector.load %arg6[%c0_3, %c0_4] : memref<8x1xf32, #tpu.memory_space<vmem>>, vector<8x1xf32>
    %cst = arith.constant dense<0xFF800000> : vector<8xf32>
    %6 = vector.multi_reduction <maximumf>, %4, %cst [1] : vector<8x128xf32> to vector<8xf32>
    %7 = vector.shape_cast %6 : vector<8xf32> to vector<8x1xf32>
    %8 = arith.maximumf %5, %7 : vector<8x1xf32>
    %9 = arith.subf %5, %8 : vector<8x1xf32>
    %10 = math.exp %9 : vector<8x1xf32>
    %11 = vector.broadcast %8 : vector<8x1xf32> to vector<8x128xf32>
    %12 = arith.subf %4, %11 : vector<8x128xf32>
    %13 = math.exp %12 : vector<8x128xf32>
    %c0_5 = arith.constant 0 : index
    %c0_6 = arith.constant 0 : index
    %14 = vector.load %arg7[%c0_5, %c0_6] : memref<8x1xf32, #tpu.memory_space<vmem>>, vector<8x1xf32>
    %15 = arith.mulf %10, %14 : vector<8x1xf32>
    %cst_7 = arith.constant dense<0.000000e+00> : vector<8xf32>
    %16 = vector.multi_reduction <add>, %13, %cst_7 [1] : vector<8x128xf32> to vector<8xf32>
    %17 = vector.shape_cast %16 : vector<8xf32> to vector<8x1xf32>
    %18 = arith.addf %15, %17 : vector<8x1xf32>
    %c0_8 = arith.constant 0 : index
    %c0_9 = arith.constant 0 : index
    %19 = vector.load %arg7[%c0_8, %c0_9] : memref<8x1xf32, #tpu.memory_space<vmem>>, vector<8x1xf32>
    tpu.vector_store %arg7[%c0_8, %c0_9], %18 {strides = array<i32>} : memref<8x1xf32, #tpu.memory_space<vmem>>, vector<8x1xf32>,
    %c0_10 = arith.constant 0 : index
    %c0_11 = arith.constant 0 : index
    %c0_12 = arith.constant 0 : index
    %20 = vector.load %arg4[%c0_10, %c0_11, %c0_12] : memref<1x4x128xf32, #tpu.memory_space<vmem>>, vector<1x4x128xf32>
    %21 = vector.shape_cast %20 : vector<1x4x128xf32> to vector<4x128xf32>
    %cst_13 = arith.constant dense<0.000000e+00> : vector<8x4xf32>
    %22 = tpu.matmul %13, %21, %cst_13 {dimension_numbers = #tpu.dot_dimension_numbers<[1], [1], [0], [0], [0, 0, 1, 0], [], []>} : vector<8x128xf32>, vector<4x128xf32>, vector<8x4xf32> -> vector<8x4xf32>
    %c0_14 = arith.constant 0 : index
    %c0_15 = arith.constant 0 : index
    %23 = vector.load %arg8[%c0_14, %c0_15] : memref<8x4xf32, #tpu.memory_space<vmem>>, vector<8x4xf32>
    %24 = vector.broadcast %10 : vector<8x1xf32> to vector<8x4xf32>
    %25 = arith.mulf %24, %23 : vector<8x4xf32>
    %26 = arith.addf %25, %22 : vector<8x4xf32>
    %c0_16 = arith.constant 0 : index
    %c0_17 = arith.constant 0 : index
    %27 = vector.load %arg8[%c0_16, %c0_17] : memref<8x4xf32, #tpu.memory_space<vmem>>, vector<8x4xf32>
    tpu.vector_store %arg8[%c0_16, %c0_17], %26 {strides = array<i32>} : memref<8x4xf32, #tpu.memory_space<vmem>>, vector<8x4xf32>,
    %c0_18 = arith.constant 0 : index
    %c0_19 = arith.constant 0 : index
    %28 = vector.load %arg6[%c0_18, %c0_19] : memref<8x1xf32, #tpu.memory_space<vmem>>, vector<8x1xf32>
    tpu.vector_store %arg6[%c0_18, %c0_19], %8 {strides = array<i32>} : memref<8x1xf32, #tpu.memory_space<vmem>>, vector<8x1xf32>,
    %c1_i32 = arith.constant 1 : i32
    %29 = arith.cmpi eq, %arg2, %c1_i32 : i32
    %30 = arith.extui %29 : i1 to i32
    %c0_i32_20 = arith.constant 0 : i32
    %31 = arith.cmpi ne, %30, %c0_i32_20 : i32
    scf.if %31 {
      %c0_21 = arith.constant 0 : index
      %c0_22 = arith.constant 0 : index
      %32 = vector.load %arg7[%c0_21, %c0_22] : memref<8x1xf32, #tpu.memory_space<vmem>>, vector<8x1xf32>
      %33 = tpu.reciprocal %32 {approx = true} : vector<8x1xf32> -> vector<8x1xf32>
      %c0_23 = arith.constant 0 : index
      %c0_24 = arith.constant 0 : index
      %34 = vector.load %arg8[%c0_23, %c0_24] : memref<8x4xf32, #tpu.memory_space<vmem>>, vector<8x4xf32>
      %35 = vector.broadcast %33 : vector<8x1xf32> to vector<8x4xf32>
      %36 = arith.mulf %34, %35 : vector<8x4xf32>
      %c0_25 = arith.constant 0 : index
      %c0_26 = arith.constant 0 : index
      %c0_27 = arith.constant 0 : index
      %37 = vector.load %arg5[%c0_25, %c0_26, %c0_27] : memref<1x8x4xf32, #tpu.memory_space<vmem>>, vector<1x8x4xf32>
      %38 = vector.shape_cast %37 : vector<1x8x4xf32> to vector<8x4xf32>
      %39 = vector.shape_cast %36 : vector<8x4xf32> to vector<1x8x4xf32>
      tpu.vector_store %arg5[%c0_25, %c0_26, %c0_27], %39 {strides = array<i32>} : memref<1x8x4xf32, #tpu.memory_space<vmem>>, vector<1x8x4xf32>,
    } else {
    }
    return
  }
  func.func @transform_0(%arg0: i32, %arg1: i32, %arg2: i32) -> (i32, i32, i32) {
    %c0_i32 = arith.constant 0 : i32
    %c0_i32_0 = arith.constant 0 : i32
    return %arg0, %c0_i32, %arg2 : i32, i32, i32
  }
  func.func @transform_1(%arg0: i32, %arg1: i32, %arg2: i32) -> (i32, i32, i32) {
    %c0_i32 = arith.constant 0 : i32
    return %arg0, %arg1, %arg2 : i32, i32, i32
  }
  func.func @transform_2(%arg0: i32, %arg1: i32, %arg2: i32) -> (i32, i32, i32) {
    %c0_i32 = arith.constant 0 : i32
    %c0_i32_0 = arith.constant 0 : i32
    return %arg0, %c0_i32, %arg1 : i32, i32, i32
  }
}

</mosaic_0001>

<llo_original>
// kernel: tpu_custom_call.1
$region0: #{tpu_custom_call.1}
  #allocation0 [shape = 'u32[]', space=smem, size = 0x4, offset = 0x4, fixed_abs, tag = 'smem constant byte address 0x4 - core index']
  #allocation1 [shape = 'u32[144,128]{1,0:T(1,128)}', space=vmem, size = 0x12000, scoped, tag = 'internal scratch']
  #allocation2 [shape = 'f32[8,1]{1,0:T(8,128)}', space=vmem, size = 0x1000, scoped, tag = 'scratch operand']
  #allocation3 [shape = 'f32[8,1]{1,0:T(8,128)}', space=vmem, size = 0x1000, scoped, tag = 'scratch operand']
  #allocation4 [shape = 'f32[8,4]{1,0:T(8,128)}', space=vmem, size = 0x1000, scoped, tag = 'scratch operand']
  %s0 = inlined_call_operand.hbm [shape: f32[2,8,256], index: 0, kind: input, shape index: {}]
  %s1 = inlined_call_operand.hbm [shape: f32[2,4,256], index: 1, kind: input, shape index: {}]
  %s2 = inlined_call_operand.vmem [shape: f32[2,8,4], index: 2, kind: output, shape index: {}]
  %s3 = sld [smem:[#allocation0]]
  $region57: #{tpu_custom_call.1} parent=0
    _
  %s5 = ssub.s32 1, %s3
  %s6 = scalar_select 0, %s5, %s3
  $region1: #{tpu_custom_call.1} parent=0
    #allocation5 [shape = 'u8[8192]{0}', space=vmem, size = 0x2000, scoped, tag = 'input window, operand 0']
    #allocation6 [shape = 's32[2]{0}', space=sflag, size = 0x8, scoped, tag = 'scoped memory for tpu_custom_call.1']
    #allocation7 [shape = 'u8[4096]{0}', space=vmem, size = 0x1000, scoped, tag = 'input window, operand 1']
    #allocation8 [shape = 's32[2]{0}', space=sflag, size = 0x8, scoped, tag = 'scoped memory for tpu_custom_call.1']
    %7 = vsyncpa [#allocation6], 0
    %s8 = scalar_lea.sflag [#allocation6], 1
    %9 = vsyncpa %s8, 0
    %10 = vsyncpa [#allocation8], 0
    %s11 = scalar_lea.sflag [#allocation8], 1
    %12 = vsyncpa %s11, 0
    loop: start=0, step=1, limit=6
    $region2: #{tpu_custom_call.1} parent=1 // loop_pre_header
      _
    $region3: #{tpu_custom_call.1} parent=1 // loop_header
      %s14 = sphi 0, %s18
      %p15 = scmp.ge.s32.totalorder %s14, 6
      %s21 = sphi 0, %s40
      %s22 = sphi 0, %s36
      %s23 = sphi 0, %s32
      %s24 = sphi 0, %s21
      %s25 = sphi 0, %s22
      %s26 = sphi 0, %s23
      %s27 = sphi 0, %s24
      %s28 = sphi 0, %s25
      %s29 = sphi 0, %s26
      %s45 = sphi 0, %s47
      %s48 = sphi 0, %s45
      %s49 = sphi 0, %s48
      %s65 = sphi 0, %s49
      %s75 = sphi 0, %s77
      %s78 = sphi 0, %s75
      %s79 = sphi 0, %s78
      %s95 = sphi 0, %s79
      %s103 = sphi 0, %s105
      %s106 = sphi 0, %s103
      %s107 = sphi 0, %s106
      %s123 = sphi 0, %s107
    $region4: #{tpu_custom_call.1} parent=1 // loop_header_branch
      %17 = sbr.rel (%p15) target = $region8
    $region5: #{tpu_custom_call.1} parent=1 // loop_body
      %s19 = ssub.s32 %s14, 1
      %s20 = ssub.s32 %s14, 2
      %s30 = sadd.s32 1, %s23
      %p31 = scmp.ge.s32.totalorder %s30, 2
      %s32 = scalar_select %p31, 0, %s30
      %s33 = sadd.s32 1, %s22
      %s34 = scalar_select %p31, %s33, %s22
      %p35 = scmp.ge.s32.totalorder %s34, 1
      %s36 = scalar_select %p35, 0, %s34
      %s37 = sadd.s32 1, %s21
      %s38 = scalar_select %p35, %s37, %s21
      %p39 = scmp.ge.s32.totalorder %s38, 2
      %s40 = scalar_select %p39, 0, %s38
      %s41 = ssub.s32 %s21, %s40
      %s42 = ssub.s32 %s23, %s32
      %s43 = sor.u32 %s41, %s42
      %p44 = scmp.eq.s32.totalorder %s43, 0
      %s46 = sadd.s32 %s45, 1
      %s47 = scalar_select %p44, %s45, %s46
      %p50 = pneg %p44
      %p51 = scmp.eq.s32.totalorder %s14, 3
      %p52 = por %p50, %p51
      %p53 = scmp.ne.s32.totalorder %s45, %s48
      %p54 = scmp.eq.s32.totalorder %s14, 0
      %p55 = por %p53, %p54
      %p56 = scmp.ne.s32.totalorder %s45, %s48
      %p57 = scmp.eq.s32.totalorder %s19, 3
      %p58 = por %p56, %p57
      %p59 = scmp.ne.s32.totalorder %s48, %s49
      %p60 = scmp.eq.s32.totalorder %s19, 0
      %p61 = por %p59, %p60
      %p62 = scmp.ne.s32.totalorder %s48, %s49
      %p63 = scmp.eq.s32.totalorder %s20, 3
      %p64 = por %p62, %p63
      %p66 = scmp.ne.s32.totalorder %s49, %s65
      %p67 = scmp.eq.s32.totalorder %s20, 0
      %p68 = por %p66, %p67
      %s69 = ssub.s32 %s21, %s40
      %s70 = ssub.s32 %s22, %s36
      %s71 = sor.u32 %s69, %s70
      %s72 = ssub.s32 %s23, %s32
      %s73 = sor.u32 %s71, %s72
      %p74 = scmp.eq.s32.totalorder %s73, 0
      %s76 = sadd.s32 %s75, 1
      %s77 = scalar_select %p74, %s75, %s76
      %p80 = pneg %p74
      %p81 = scmp.eq.s32.totalorder %s14, 3
      %p82 = por %p80, %p81
      %p83 = scmp.ne.s32.totalorder %s75, %s78
      %p84 = scmp.eq.s32.totalorder %s14, 0
      %p85 = por %p83, %p84
      %p86 = scmp.ne.s32.totalorder %s75, %s78
      %p87 = scmp.eq.s32.totalorder %s19, 3
      %p88 = por %p86, %p87
      %p89 = scmp.ne.s32.totalorder %s78, %s79
      %p90 = scmp.eq.s32.totalorder %s19, 0
      %p91 = por %p89, %p90
      %p92 = scmp.ne.s32.totalorder %s78, %s79
      %p93 = scmp.eq.s32.totalorder %s20, 3
      %p94 = por %p92, %p93
      %p96 = scmp.ne.s32.totalorder %s79, %s95
      %p97 = scmp.eq.s32.totalorder %s20, 0
      %p98 = por %p96, %p97
      %s99 = ssub.s32 %s21, %s40
      %s100 = ssub.s32 %s22, %s36
      %s101 = sor.u32 %s99, %s100
      %p102 = scmp.eq.s32.totalorder %s101, 0
      %s104 = sadd.s32 %s103, 1
      %s105 = scalar_select %p102, %s103, %s104
      %p108 = pneg %p102
      %p109 = scmp.eq.s32.totalorder %s14, 3
      %p110 = por %p108, %p109
      %p111 = scmp.ne.s32.totalorder %s103, %s106
      %p112 = scmp.eq.s32.totalorder %s14, 0
      %p113 = por %p111, %p112
      %p114 = scmp.ne.s32.totalorder %s103, %s106
      %p115 = scmp.eq.s32.totalorder %s19, 3
      %p116 = por %p114, %p115
      %p117 = scmp.ne.s32.totalorder %s106, %s107
      %p118 = scmp.eq.s32.totalorder %s19, 0
      %p119 = por %p117, %p118
      %p120 = scmp.ne.s32.totalorder %s106, %s107
      %p121 = scmp.eq.s32.totalorder %s20, 3
      %p122 = por %p120, %p121
      %p124 = scmp.ne.s32.totalorder %s107, %s123
      %p125 = scmp.eq.s32.totalorder %s20, 0
      %p126 = por %p124, %p125
      %p127 = scmp.le.s32.totalorder 1, %s14
      %p128 = scmp.lt.s32.totalorder %s14, 5
      %p129 = pnand %p127, %p128
      %p130 = pneg %p129
      // Predicated region
      $region9: #{tpu_custom_call.1} parent=5 // pred_check
        _
      $region10: #{tpu_custom_call.1} parent=5 // pred_check_branch
        %132 = sbr.rel (%p129) target = $region12
      $region11: #{tpu_custom_call.1} parent=5 // pred_region
        %s133 = ssub.s32 %s14, 1
      $region12: #{tpu_custom_call.1} parent=5 // pred_fallthru
        _
      %p134 = scmp.lt.s32.totalorder %s14, 4
      // Predicated region
      $region13: #{tpu_custom_call.1} parent=5 // pred_check
        %p135 = pneg %p134
      $region14: #{tpu_custom_call.1} parent=5 // pred_check_branch
        %137 = sbr.rel (%p135) target = $region16
      $region15: #{tpu_custom_call.1} parent=5 // pred_region
        // Predicated region
        $region17: #{tpu_custom_call.1} parent=15 // pred_check
          %p138 = pneg %p55
        $region18: #{tpu_custom_call.1} parent=15 // pred_check_branch
          %140 = sbr.rel (%p138) target = $region20
        $region19: #{tpu_custom_call.1} parent=15 // pred_region
          %s141 = sand.u32 %s45, 1
          %s142 = scalar_lea.sflag [#allocation6], %s141
          %s143 = sand.u32 %s45, 1
          %s144 = smul.addr %s143, 8
          %s145 = scalar_lea.vmem [#allocation5], %s144
          %s147 = ssub.s32 128, 128
          %148 = vsyncadd %s142, %s147
          %s149 = smul.addr %s21, 2
          %s150 = sadd.s32 %s23, %s149
          %s151 = smul.addr %s150, 128
          %s152 = scalar_lea.hbm %s0, %s151
          %s154 = sshll.u32 %s145, 4
          %s155 = int_to_ptr.vmem [resolvable:$true] %s154
          %157 = dma.hbm_to_vmem [thread:$0]  %s152, 128, %s155, %s142
        $region20: #{tpu_custom_call.1} parent=15 // pred_fallthru
          _
        // Predicated region
        $region21: #{tpu_custom_call.1} parent=15 // pred_check
          %p158 = pneg %p85
        $region22: #{tpu_custom_call.1} parent=15 // pred_check_branch
          %160 = sbr.rel (%p158) target = $region24
        $region23: #{tpu_custom_call.1} parent=15 // pred_region
          %s161 = sand.u32 %s75, 1
          %s162 = scalar_lea.sflag [#allocation8], %s161
          %s163 = sand.u32 %s75, 1
          %s164 = smul.addr %s163, 4
          %s165 = scalar_lea.vmem [#allocation7], %s164
          %s167 = ssub.s32 64, 64
          %168 = vsyncadd %s162, %s167
          %s169 = smul.addr %s22, 2
          %s170 = sadd.s32 %s23, %s169
          %s171 = smul.addr %s21, 2
          %s172 = sadd.s32 %s170, %s171
          %s173 = smul.addr %s172, 64
          %s174 = scalar_lea.hbm %s1, %s173
          %s176 = sshll.u32 %s165, 4
          %s177 = int_to_ptr.vmem [resolvable:$true] %s176
          %179 = dma.hbm_to_vmem [thread:$0]  %s174, 64, %s177, %s162
        $region24: #{tpu_custom_call.1} parent=15 // pred_fallthru
          _
      $region16: #{tpu_custom_call.1} parent=5 // pred_fallthru
        _
      %p180 = scmp.le.s32.totalorder 1, %s14
      %p181 = scmp.lt.s32.totalorder %s14, 5
      %p182 = pnand %p180, %p181
      %p183 = pneg %p182
      // Predicated region
      $region25: #{tpu_custom_call.1} parent=5 // pred_check
        _
      $region26: #{tpu_custom_call.1} parent=5 // pred_check_branch
        %185 = sbr.rel (%p182) target = $region28
      $region27: #{tpu_custom_call.1} parent=5 // pred_region
        %s186 = ssub.s32 %s14, 1
        %s187 = sand.u32 %s48, 1
        %s188 = scalar_lea.sflag [#allocation6], %s187
        %s189 = sand.u32 %s48, 1
        %s190 = smul.addr %s189, 8
        %s191 = scalar_lea.vmem [#allocation5], %s190
        // Predicated region
        $region29: #{tpu_custom_call.1} parent=27 // pred_check
          %p192 = pneg %p61
        $region30: #{tpu_custom_call.1} parent=27 // pred_check_branch
          %194 = sbr.rel (%p192) target = $region32
        $region31: #{tpu_custom_call.1} parent=27 // pred_region
          %195 = dma.done %s188, 128
        $region32: #{tpu_custom_call.1} parent=27 // pred_fallthru
          _
        %s196 = sand.u32 %s78, 1
        %s197 = scalar_lea.sflag [#allocation8], %s196
        %s198 = sand.u32 %s78, 1
        %s199 = smul.addr %s198, 4
        %s200 = scalar_lea.vmem [#allocation7], %s199
        // Predicated region
        $region33: #{tpu_custom_call.1} parent=27 // pred_check
          %p201 = pneg %p91
        $region34: #{tpu_custom_call.1} parent=27 // pred_check_branch
          %203 = sbr.rel (%p201) target = $region36
        $region35: #{tpu_custom_call.1} parent=27 // pred_region
          %204 = dma.done %s197, 64
        $region36: #{tpu_custom_call.1} parent=27 // pred_fallthru
          _
        %s205 = sand.u32 %s48, 1
        %s206 = scalar_lea.sflag [#allocation6], %s205
        %s207 = sand.u32 %s48, 1
        %s208 = smul.addr %s207, 8
        %s209 = scalar_lea.vmem [#allocation5], %s208
        %p210 = pneg %p61
        %p211 = pneg %p58
        %s212 = sand.u32 %s78, 1
        %s213 = scalar_lea.sflag [#allocation8], %s212
        %s214 = sand.u32 %s78, 1
        %s215 = smul.addr %s214, 4
        %s216 = scalar_lea.vmem [#allocation7], %s215
        %p217 = pneg %p91
        %p218 = pneg %p88
        %p219 = pneg %p119
        %p220 = pneg %p116
        %p221 = scmp.lt.s32.totalorder %s24, 1
        %s222 = scalar_select %p221, %s24, 1
        %p223 = scmp.lt.s32.totalorder %s25, 0
        %s224 = scalar_select %p223, %s25, 0
        %s225 = sadd.s32 %s224, %s222
        %s226 = smul.addr %s225, 8
        %s227 = scalar_lea.vmem %s2, %s226
        %p228 = scmp.lt.s32.totalorder %s24, 1
        %s229 = scalar_select %p228, %s24, 1
        %p230 = scmp.lt.s32.totalorder %s25, 0
        %s231 = scalar_select %p230, %s25, 0
        %s232 = sadd.s32 %s231, %s229
        %s233 = smul.addr %s232, 8
        %s234 = scalar_lea.vmem %s2, %s233
        %p235 = scmp.eq.s32.totalorder %s26, 0
        // Predicated region
        $region37: #{tpu_custom_call.1} parent=27 // pred_check
          %p236 = pneg %p235
        $region38: #{tpu_custom_call.1} parent=27 // pred_check_branch
          %238 = sbr.rel (%p236) target = $region40
        $region39: #{tpu_custom_call.1} parent=27 // pred_region
          %vm239 = vcmask 7168
          %240 = vst.msk [vmem:[#allocation2] sm:$0xff] %vm239, -inf
          %241 = vst.msk [vmem:[#allocation3] sm:$0xff] %vm239, 0.0
          %vm242 = vcmask 31744
          %243 = vst.msk [vmem:[#allocation4] sm:$0xff] %vm242, 0.0
        $region40: #{tpu_custom_call.1} parent=27 // pred_fallthru
          _
        %v244 = vld [vmem:[%s191] sm:$0xff]
        %v245 = vld [vmem:[#allocation2] sm:$0xff]
        %246 = vmax.xlane.f32.xlu0 %v244
        %v247 = vpop.xlane.xlu0 %246
        %v248 = vmax.f32 %v245, %v247
        %v249 = vsub.f32 %v245, %v248
        %v250 = vmul.f32 %v249, 1.442695
        %v251 = vpow.pop %v250
        %253 = vset.pattern.permute.xlu0 0
        %254 = vperm.xlu0 %253, %v248
        %v255 = vpop.permute.xlu0 %254
        %v257 = vsub.f32 %v244, %v255
        %v258 = vmul.f32 %v257, 1.442695
        %v259 = vpow.pop %v258
        %v260 = vld [vmem:[#allocation3] sm:$0xff]
        %v261 = vmul.f32 %v251, %v260
        %262 = vadd.xlane.f32.xlu0 %v259
        %v263 = vpop.xlane.xlu0 %262
        %v264 = vadd.f32 %v261, %v263
        %vm265 = vcmask 7168
        %266 = vst.msk [vmem:[#allocation3] sm:$0xff] %vm265, %v264
        %v267 = vld [vmem:[%s200] sm:$0xf]
        %268 = vmatprep.subr.mxu0 0.0
        %269 = vmatpush1.xpose.msra.mxu0 0.0
        %270 = vmatprep.subr.mxu0 0.0
        %271 = vmatpush1.xpose.msra.mxu0 0.0
        %272 = vmatprep.subr.mxu0 0.0
        %273 = vmatpush1.xpose.msra.mxu0 0.0
        %274 = vmatprep.subr.mxu0 0.0
        %275 = vmatpush1.xpose.msra.mxu0 0.0
        %276 = vmatprep.subr.mxu0 0.0
        %277 = vmatpush1.xpose.msra.mxu0 0.0
        %278 = vmatprep.subr.mxu0 0.0
        %279 = vmatpush1.xpose.msra.mxu0 0.0
        %280 = vmatprep.subr.mxu0 0.0
        %281 = vmatpush1.xpose.msra.mxu0 0.0
        %282 = vmatprep.subr.mxu0 0.0
        %283 = vmatpush1.xpose.msra.mxu0 0.0
        %284 = vmatprep.subr.mxu0 0.0
        %285 = vmatpush1.xpose.msra.mxu0 0.0
        %286 = vmatprep.subr.mxu0 0.0
        %287 = vmatpush1.xpose.msra.mxu0 0.0
        %288 = vmatprep.subr.mxu0 0.0
        %289 = vmatpush1.xpose.msra.mxu0 0.0
        %290 = vmatprep.subr.mxu0 0.0
        %291 = vmatpush1.xpose.msra.mxu0 0.0
        %292 = vmatprep.subr.mxu0 0.0
        %293 = vmatpush1.xpose.msra.mxu0 0.0
        %294 = vmatprep.subr.mxu0 0.0
        %295 = vmatpush1.xpose.msra.mxu0 0.0
        %296 = vmatprep.subr.mxu0 0.0
        %297 = vmatpush1.xpose.msra.mxu0 0.0
        %298 = vmatprep.subr.mxu0 0.0
        %299 = vmatpush1.xpose.msra.mxu0 %v267
        %300 = vmatprep.subr.mxu0 0.0
        %301 = vmatpush2.xpose.msra.mxu0 0.0
        %302 = vmatprep.subr.mxu0 0.0
        %303 = vmatpush2.xpose.msra.mxu0 0.0
        %304 = vmatprep.subr.mxu0 0.0
        %305 = vmatpush2.xpose.msra.mxu0 0.0
        %306 = vmatprep.subr.mxu0 0.0
        %307 = vmatpush2.xpose.msra.mxu0 0.0
        %308 = vmatprep.subr.mxu0 0.0
        %309 = vmatpush2.xpose.msra.mxu0 0.0
        %310 = vmatprep.subr.mxu0 0.0
        %311 = vmatpush2.xpose.msra.mxu0 0.0
        %312 = vmatprep.subr.mxu0 0.0
        %313 = vmatpush2.xpose.msra.mxu0 0.0
        %314 = vmatprep.subr.mxu0 0.0
        %315 = vmatpush2.xpose.msra.mxu0 0.0
        %316 = vmatprep.subr.mxu0 0.0
        %317 = vmatpush2.xpose.msra.mxu0 0.0
        %318 = vmatprep.subr.mxu0 0.0
        %319 = vmatpush2.xpose.msra.mxu0 0.0
        %320 = vmatprep.subr.mxu0 0.0
        %321 = vmatpush2.xpose.msra.mxu0 0.0
        %322 = vmatprep.subr.mxu0 0.0
        %323 = vmatpush2.xpose.msra.mxu0 0.0
        %324 = vmatprep.subr.mxu0 0.0
        %325 = vmatpush2.xpose.msra.mxu0 0.0
        %326 = vmatprep.subr.mxu0 0.0
        %327 = vmatpush2.xpose.msra.mxu0 0.0
        %328 = vmatprep.subr.mxu0 0.0
        %329 = vmatpush2.xpose.msra.mxu0 0.0
        %330 = vmatprep.subr.mxu0 0.0
        %331 = vmatpush2.xpose.msra.mxu0 0.0
        %332 = vmatprep.mubr.f32.mxu0 0.0
        %333 = vmatmul.mubr.f32.gmra.mxu0 %v259
        %v334 = vpop.f32.mrf.mxu0
        %v335 = vadd.f32 0.0, %v334
        %v336 = vpop.f32.mrf.mxu0
        %337 = vdwg.mxu0
        %v338 = vld [vmem:[#allocation4] sm:$0xff]
        %340 = vset.pattern.permute.xlu0 0
        %341 = vperm.xlu0 %340, %v251
        %v342 = vpop.permute.xlu0 %341
        %v344 = vmul.f32 %v342, %v338
        %v345 = vadd.f32 %v344, %v335
        %vm346 = vcmask 31744
        %347 = vst.msk [vmem:[#allocation4] sm:$0xff] %vm346, %v345
        %348 = vst.msk [vmem:[#allocation2] sm:$0xff] %vm265, %v248
        %p349 = scmp.eq.s32.totalorder %s26, 1
        // Predicated region
        $region41: #{tpu_custom_call.1} parent=27 // pred_check
          %p350 = pneg %p349
        $region42: #{tpu_custom_call.1} parent=27 // pred_check_branch
          %352 = sbr.rel (%p350) target = $region44
        $region43: #{tpu_custom_call.1} parent=27 // pred_region
          %v353 = vld [vmem:[#allocation3] sm:$0xff]
          %v354 = vrcp.pop %v353
          %v355 = vld [vmem:[#allocation4] sm:$0xff]
          %357 = vset.pattern.permute.xlu0 0
          %358 = vperm.xlu0 %357, %v354
          %v359 = vpop.permute.xlu0 %358
          %v361 = vmul.f32 %v355, %v359
          %362 = vst.msk [vmem:[%s234] sm:$0xff] %vm346, %v361
        $region44: #{tpu_custom_call.1} parent=27 // pred_fallthru
          _
        %p363 = scmp.lt.s32.totalorder %s24, 1
        %s364 = scalar_select %p363, %s24, 1
        %p365 = scmp.lt.s32.totalorder %s25, 0
        %s366 = scalar_select %p365, %s25, 0
        %s367 = sadd.s32 %s366, %s364
        %s368 = smul.addr %s367, 8
        %s369 = scalar_lea.vmem %s2, %s368
        // Predicated region
        $region45: #{tpu_custom_call.1} parent=27 // pred_check
          %p370 = pneg %p116
        $region46: #{tpu_custom_call.1} parent=27 // pred_check_branch
          %372 = sbr.rel (%p370) target = $region48
        $region47: #{tpu_custom_call.1} parent=27 // pred_region
          _
        $region48: #{tpu_custom_call.1} parent=27 // pred_fallthru
          _
      $region28: #{tpu_custom_call.1} parent=5 // pred_fallthru
        _
      %p373 = scmp.le.s32.totalorder 2, %s14
      // Predicated region
      $region49: #{tpu_custom_call.1} parent=5 // pred_check
        %p374 = pneg %p373
      $region50: #{tpu_custom_call.1} parent=5 // pred_check_branch
        %376 = sbr.rel (%p374) target = $region52
      $region51: #{tpu_custom_call.1} parent=5 // pred_region
        %s377 = ssub.s32 %s14, 2
        // Predicated region
        $region53: #{tpu_custom_call.1} parent=51 // pred_check
          %p378 = pneg %p122
        $region54: #{tpu_custom_call.1} parent=51 // pred_check_branch
          %380 = sbr.rel (%p378) target = $region56
        $region55: #{tpu_custom_call.1} parent=51 // pred_region
          %p381 = scmp.lt.s32.totalorder %s27, 1
          %s382 = scalar_select %p381, %s27, 1
          %p383 = scmp.lt.s32.totalorder %s28, 0
          %s384 = scalar_select %p383, %s28, 0
          %s385 = sadd.s32 %s384, %s382
          %s386 = smul.addr %s385, 8
          %s387 = scalar_lea.vmem %s2, %s386
        $region56: #{tpu_custom_call.1} parent=51 // pred_fallthru
          _
      $region52: #{tpu_custom_call.1} parent=5 // pred_fallthru
        _
    $region6: #{tpu_custom_call.1} parent=1 // loop_footer
      %s18 = sadd.s32 1, %s14
    $region7: #{tpu_custom_call.1} parent=1 // loop_footer_branch
      %13 = sbr.rel target = $region3
    $region8: #{tpu_custom_call.1} parent=1 // loop_exit
      _
    %388 = vsyncpa [#allocation6], 1
    %s389 = scalar_lea.sflag [#allocation6], 1
    %390 = vsyncpa %s389, 1
    %391 = vsyncpa [#allocation8], 1
    %s392 = scalar_lea.sflag [#allocation8], 1
    %393 = vsyncpa %s392, 1

</llo_original>
